<compile_context>
chip_gen: v6e
topology: v6e:2x2x1
jax: 0.10.0
libtpu: 0.0.40
codegen_flags: <defaults>
</compile_context>

<pallas_src>
import functools

import jax
import jax.numpy as jnp
from jax.experimental import pallas as pl
from jax.experimental.pallas import tpu as pltpu


# ---------------------------------------------------------------------------
# Helpers
# ---------------------------------------------------------------------------

def _round_up(n, m):
    return ((n + m - 1) // m) * m


def _pad2d(a, rows, cols):
    r, c = a.shape
    if r == rows and c == cols:
        return a
    return jnp.pad(a, ((0, rows - r), (0, cols - c)))


# ---------------------------------------------------------------------------
# Fused whole-MLP kernel
# ---------------------------------------------------------------------------

def _make_mlp_kernel(num_hidden, compute_dtype):
    """One grid step == one row tile through the whole MLP.

    Ref order: x_ref,
               [w_i, b_i, scale_i, shift_i] * num_hidden,
               w_last, b_last,
               out_ref.
    Weights are (C_in_pad, C_out_pad) (already transposed from torch layout),
    bias/scale/shift are (1, C_out_pad) float32.
    """

    def kernel(*refs):
        x_ref = refs[0]
        out_ref = refs[-1]

        h = x_ref[...]                                    # (tm, C_in_pad)
        idx = 1
        for _ in range(num_hidden):
            w_ref, b_ref, scale_ref, shift_ref = refs[idx:idx + 4]
            idx += 4
            y = jnp.dot(h, w_ref[...],
                        preferred_element_type=jnp.float32)   # f32 accumulate
            y = y + b_ref[...]                                 # bias
            y = jnp.maximum(y, 0.0)                            # ReLU
            y = y * scale_ref[...] + shift_ref[...]            # folded BN (eval)
            h = y.astype(compute_dtype)                        # next MXU input

        w_ref, b_ref = refs[idx], refs[idx + 1]
        y = jnp.dot(h, w_ref[...], preferred_element_type=jnp.float32)
        y = y + b_ref[...]
        out_ref[...] = y.astype(out_ref.dtype)                 # lane-dense slab

    return kernel


# ---------------------------------------------------------------------------
# One-time parameter preparation (outside the jitted forward)
# ---------------------------------------------------------------------------

def prepare_mlp_params(weights, biases, bn_gammas, bn_betas, bn_means, bn_vars,
                       eps=1e-5, compute_dtype=jnp.bfloat16):
    """Transpose torch-layout [C_out, C_in] weights, fold eval-mode BatchNorm
    into a per-feature (scale, shift), zero-pad all feature dims to multiples
    of 128, and cast matmul operands to compute_dtype.  Done once, not per call.
    """
    num_layers = len(weights)
    flat = []
    for i in range(num_layers):
        c_out, c_in = weights[i].shape
        cin_p = _round_up(c_in, 128)
        cout_p = _round_up(c_out, 128)

        w_t = jnp.transpose(weights[i]).astype(jnp.float32)     # [C_in, C_out]
        flat.append(_pad2d(w_t, cin_p, cout_p).astype(compute_dtype))

        b = biases[i].astype(jnp.float32).reshape(1, c_out)
        flat.append(_pad2d(b, 1, cout_p))                       # f32 epilogue

        if i < num_layers - 1:
            inv_std = 1.0 / jnp.sqrt(bn_vars[i].astype(jnp.float32) + eps)
            scale = bn_gammas[i].astype(jnp.float32) * inv_std
            shift = (bn_betas[i].astype(jnp.float32)
                     - bn_means[i].astype(jnp.float32) * scale)
            flat.append(_pad2d(scale.reshape(1, c_out), 1, cout_p))
            flat.append(_pad2d(shift.reshape(1, c_out), 1, cout_p))
    return tuple(flat)


# ---------------------------------------------------------------------------
# Jitted forward
# ---------------------------------------------------------------------------

@functools.partial(jax.jit,
                   static_argnames=("num_layers", "out_channels",
                                    "compute_dtype"))
def mlp_forward(x, params, *, num_layers, out_channels,
                compute_dtype=jnp.bfloat16):
    """x: [M, C_in] float32.  params: output of prepare_mlp_params."""
    num_hidden = num_layers - 1
    m, _ = x.shape

    cin_pad = params[0].shape[0]              # padded input width
    w_last = params[4 * num_hidden]
    cout_pad = w_last.shape[1]                # padded output width

    # Row padding / tile choice: multiples of 128; prefer 256-row tiles only
    # when that still leaves >= 2 grid steps (keeps both v7x cores busy).
    m_pad = _round_up(m, 128)
    tm = 256 if (m_pad % 256 == 0 and m_pad // 256 >= 2) else 128
    grid = (m_pad // tm,)

    x_p = _pad2d(x.astype(jnp.float32), m_pad, cin_pad).astype(compute_dtype)

    in_specs = [pl.BlockSpec((tm, cin_pad), lambda i: (i, 0))]
    in_specs += [pl.BlockSpec(p.shape, lambda i: (0, 0)) for p in params]

    # Rough VMEM budget (resident params + double-buffered I/O tiles), capped
    # at 48 MiB so v7x (64 MiB physical per core) keeps headroom.
    param_bytes = sum(int(p.size) * p.dtype.itemsize for p in params)
    io_bytes = 2 * (tm * cin_pad * jnp.dtype(compute_dtype).itemsize
                    + tm * cout_pad * 4)
    vmem_limit = int(min(48 * 1024 * 1024,
                         max(8 * 1024 * 1024, 4 * (param_bytes + io_bytes))))

    out_pad = pl.pallas_call(
        _make_mlp_kernel(num_hidden, compute_dtype),
        out_shape=jax.ShapeDtypeStruct((m_pad, cout_pad), jnp.float32),
        grid_spec=pltpu.PrefetchScalarGridSpec(
            num_scalar_prefetch=0,
            grid=grid,
            in_specs=in_specs,
            out_specs=pl.BlockSpec((tm, cout_pad), lambda i: (i, 0)),
            scratch_shapes=[],
        ),
        compiler_params=pltpu.CompilerParams(
            dimension_semantics=("parallel",),
            vmem_limit_bytes=vmem_limit,
        ),
    )(x_p, *params)

    return out_pad[:m, :out_channels]


# ---------------------------------------------------------------------------
# Pure-JAX reference (eval-mode PyTorch semantics)
# ---------------------------------------------------------------------------

def reference_forward(x, weights, biases, bn_gammas, bn_betas, bn_means,
                      bn_vars, eps=1e-5):
    h = x
    for i in range(len(weights) - 1):
        h = h @ weights[i].T + biases[i]
        h = jnp.maximum(h, 0.0)
        h = bn_gammas[i] * (h - bn_means[i]) / jnp.sqrt(bn_vars[i] + eps) \
            + bn_betas[i]
    return h @ weights[-1].T + biases[-1]


# ---------------------------------------------------------------------------
# Demo / self-test
# ---------------------------------------------------------------------------

if __name__ == "__main__":
    key = jax.random.PRNGKey(0)
    N = 256              # number of nodes
    C_IN = 256           # in_channels
    C_HID = 128          # hidden_channels
    C_OUT = 64           # out_channels
    NUM_LAYERS = 3

    dims = [C_IN] + [C_HID] * (NUM_LAYERS - 1) + [C_OUT]

    keys = jax.random.split(key, 2 + 6 * NUM_LAYERS)
    x = jax.random.normal(keys[0], (N, C_IN), dtype=jnp.float32)

    weights, biases = [], []
    bn_gammas, bn_betas, bn_means, bn_vars = [], [], [], []
    ki = 1
    for layer in range(NUM_LAYERS):
        c_in, c_out = dims[layer], dims[layer + 1]
        bound = 1.0 / (c_in ** 0.5)
        weights.append(jax.random.uniform(
            keys[ki], (c_out, c_in), minval=-bound, maxval=bound,
            dtype=jnp.float32)); ki += 1
        biases.append(jax.random.uniform(
            keys[ki], (c_out,), minval=-bound, maxval=bound,
            dtype=jnp.float32)); ki += 1
        if layer < NUM_LAYERS - 1:
            bn_gammas.append(1.0 + 0.1 * jax.random.normal(
                keys[ki], (c_out,), dtype=jnp.float32)); ki += 1
            bn_betas.append(0.1 * jax.random.normal(
                keys[ki], (c_out,), dtype=jnp.float32)); ki += 1
            bn_means.append(0.2 * jax.random.normal(
                keys[ki], (c_out,), dtype=jnp.float32)); ki += 1
            bn_vars.append(0.5 + jax.random.uniform(
                keys[ki], (c_out,), dtype=jnp.float32)); ki += 1

    # One-time prep: transpose / fold BN / pad / cast (not in the hot path).
    params = prepare_mlp_params(weights, biases, bn_gammas, bn_betas,
                                bn_means, bn_vars)
    params = jax.block_until_ready(params)

    out = mlp_forward(x, params, num_layers=NUM_LAYERS, out_channels=C_OUT)
    out = jax.block_until_ready(out)

    ref = reference_forward(x, weights, biases, bn_gammas, bn_betas, bn_means,
                            bn_vars)
    assert out.shape == (N, C_OUT), out.shape
    max_err = float(jnp.max(jnp.abs(out - ref)))
    # bf16 MXU inputs with f32 accumulation -> ~1e-2 level error is expected.
    assert jnp.allclose(out, ref, atol=5e-2, rtol=5e-2), max_err

    print("KERNEL_OK")
</pallas_src>

<mosaic_0001>
module attributes {stable_mosaic.version = 11 : i64} {
  func.func @kernel(%arg0: i32, %arg1: memref<128x256xbf16, #tpu.memory_space<vmem>>, %arg2: memref<256x128xbf16, #tpu.memory_space<vmem>>, %arg3: memref<1x128xf32, #tpu.memory_space<vmem>>, %arg4: memref<1x128xf32, #tpu.memory_space<vmem>>, %arg5: memref<1x128xf32, #tpu.memory_space<vmem>>, %arg6: memref<128x128xbf16, #tpu.memory_space<vmem>>, %arg7: memref<1x128xf32, #tpu.memory_space<vmem>>, %arg8: memref<1x128xf32, #tpu.memory_space<vmem>>, %arg9: memref<1x128xf32, #tpu.memory_space<vmem>>, %arg10: memref<128x128xbf16, #tpu.memory_space<vmem>>, %arg11: memref<1x128xf32, #tpu.memory_space<vmem>>, %arg12: memref<128x128xf32, #tpu.memory_space<vmem>>) attributes {dimension_semantics = [#tpu.dimension_semantics<parallel>], iteration_bounds = array<i64: 2>, scalar_prefetch = 0 : i64, scratch_operands = 0 : i64, tpu.core_type = #tpu.core_type<tc>, window_params = [{transform_indices = @transform_0, window_bounds = array<i64: 128, 256>}, {pipeline_mode = #tpu.pipeline_mode<synchronous>, transform_indices = @transform_1, window_bounds = array<i64: 256, 128>}, {pipeline_mode = #tpu.pipeline_mode<synchronous>, transform_indices = @transform_2, window_bounds = array<i64: 1, 128>}, {pipeline_mode = #tpu.pipeline_mode<synchronous>, transform_indices = @transform_3, window_bounds = array<i64: 1, 128>}, {pipeline_mode = #tpu.pipeline_mode<synchronous>, transform_indices = @transform_4, window_bounds = array<i64: 1, 128>}, {pipeline_mode = #tpu.pipeline_mode<synchronous>, transform_indices = @transform_5, window_bounds = array<i64: 128, 128>}, {pipeline_mode = #tpu.pipeline_mode<synchronous>, transform_indices = @transform_6, window_bounds = array<i64: 1, 128>}, {pipeline_mode = #tpu.pipeline_mode<synchronous>, transform_indices = @transform_7, window_bounds = array<i64: 1, 128>}, {pipeline_mode = #tpu.pipeline_mode<synchronous>, transform_indices = @transform_8, window_bounds = array<i64: 1, 128>}, {pipeline_mode = #tpu.pipeline_mode<synchronous>, transform_indices = @transform_9, window_bounds = array<i64: 128, 128>}, {pipeline_mode = #tpu.pipeline_mode<synchronous>, transform_indices = @transform_10, window_bounds = array<i64: 1, 128>}, {transform_indices = @transform_11, window_bounds = array<i64: 128, 128>}]} {
    %c0 = arith.constant 0 : index
    %c0_0 = arith.constant 0 : index
    %0 = vector.load %arg1[%c0, %c0_0] : memref<128x256xbf16, #tpu.memory_space<vmem>>, vector<128x256xbf16>
    %c0_1 = arith.constant 0 : index
    %c0_2 = arith.constant 0 : index
    %1 = vector.load %arg2[%c0_1, %c0_2] : memref<256x128xbf16, #tpu.memory_space<vmem>>, vector<256x128xbf16>
    %cst = arith.constant dense<0.000000e+00> : vector<128x128xf32>
    %2 = tpu.matmul %0, %1, %cst {dimension_numbers = #tpu.dot_dimension_numbers<[1], [0], [0], [1], [0, 0, 1, 1], [], []>} : vector<128x256xbf16>, vector<256x128xbf16>, vector<128x128xf32> -> vector<128x128xf32>
    %c0_3 = arith.constant 0 : index
    %c0_4 = arith.constant 0 : index
    %3 = vector.load %arg3[%c0_3, %c0_4] : memref<1x128xf32, #tpu.memory_space<vmem>>, vector<1x128xf32>
    %4 = vector.broadcast %3 : vector<1x128xf32> to vector<128x128xf32>
    %5 = arith.addf %2, %4 : vector<128x128xf32>
    %cst_5 = arith.constant 0.000000e+00 : f32
    %6 = vector.broadcast %cst_5 : f32 to vector<128x128xf32>
    %7 = arith.maximumf %5, %6 : vector<128x128xf32>
    %c0_6 = arith.constant 0 : index
    %c0_7 = arith.constant 0 : index
    %8 = vector.load %arg4[%c0_6, %c0_7] : memref<1x128xf32, #tpu.memory_space<vmem>>, vector<1x128xf32>
    %9 = vector.broadcast %8 : vector<1x128xf32> to vector<128x128xf32>
    %10 = arith.mulf %7, %9 : vector<128x128xf32>
    %c0_8 = arith.constant 0 : index
    %c0_9 = arith.constant 0 : index
    %11 = vector.load %arg5[%c0_8, %c0_9] : memref<1x128xf32, #tpu.memory_space<vmem>>, vector<1x128xf32>
    %12 = vector.broadcast %11 : vector<1x128xf32> to vector<128x128xf32>
    %13 = arith.addf %10, %12 : vector<128x128xf32>
    %14 = arith.truncf %13 : vector<128x128xf32> to vector<128x128xbf16>
    %c0_10 = arith.constant 0 : index
    %c0_11 = arith.constant 0 : index
    %15 = vector.load %arg6[%c0_10, %c0_11] : memref<128x128xbf16, #tpu.memory_space<vmem>>, vector<128x128xbf16>
    %cst_12 = arith.constant dense<0.000000e+00> : vector<128x128xf32>
    %16 = tpu.matmul %14, %15, %cst_12 {dimension_numbers = #tpu.dot_dimension_numbers<[1], [0], [0], [1], [0, 0, 1, 1], [], []>} : vector<128x128xbf16>, vector<128x128xbf16>, vector<128x128xf32> -> vector<128x128xf32>
    %c0_13 = arith.constant 0 : index
    %c0_14 = arith.constant 0 : index
    %17 = vector.load %arg7[%c0_13, %c0_14] : memref<1x128xf32, #tpu.memory_space<vmem>>, vector<1x128xf32>
    %18 = vector.broadcast %17 : vector<1x128xf32> to vector<128x128xf32>
    %19 = arith.addf %16, %18 : vector<128x128xf32>
    %cst_15 = arith.constant 0.000000e+00 : f32
    %20 = vector.broadcast %cst_15 : f32 to vector<128x128xf32>
    %21 = arith.maximumf %19, %20 : vector<128x128xf32>
    %c0_16 = arith.constant 0 : index
    %c0_17 = arith.constant 0 : index
    %22 = vector.load %arg8[%c0_16, %c0_17] : memref<1x128xf32, #tpu.memory_space<vmem>>, vector<1x128xf32>
    %23 = vector.broadcast %22 : vector<1x128xf32> to vector<128x128xf32>
    %24 = arith.mulf %21, %23 : vector<128x128xf32>
    %c0_18 = arith.constant 0 : index
    %c0_19 = arith.constant 0 : index
    %25 = vector.load %arg9[%c0_18, %c0_19] : memref<1x128xf32, #tpu.memory_space<vmem>>, vector<1x128xf32>
    %26 = vector.broadcast %25 : vector<1x128xf32> to vector<128x128xf32>
    %27 = arith.addf %24, %26 : vector<128x128xf32>
    %28 = arith.truncf %27 : vector<128x128xf32> to vector<128x128xbf16>
    %c0_20 = arith.constant 0 : index
    %c0_21 = arith.constant 0 : index
    %29 = vector.load %arg10[%c0_20, %c0_21] : memref<128x128xbf16, #tpu.memory_space<vmem>>, vector<128x128xbf16>
    %cst_22 = arith.constant dense<0.000000e+00> : vector<128x128xf32>
    %30 = tpu.matmul %28, %29, %cst_22 {dimension_numbers = #tpu.dot_dimension_numbers<[1], [0], [0], [1], [0, 0, 1, 1], [], []>} : vector<128x128xbf16>, vector<128x128xbf16>, vector<128x128xf32> -> vector<128x128xf32>
    %c0_23 = arith.constant 0 : index
    %c0_24 = arith.constant 0 : index
    %31 = vector.load %arg11[%c0_23, %c0_24] : memref<1x128xf32, #tpu.memory_space<vmem>>, vector<1x128xf32>
    %32 = vector.broadcast %31 : vector<1x128xf32> to vector<128x128xf32>
    %33 = arith.addf %30, %32 : vector<128x128xf32>
    %c0_25 = arith.constant 0 : index
    %c0_26 = arith.constant 0 : index
    %34 = vector.load %arg12[%c0_25, %c0_26] : memref<128x128xf32, #tpu.memory_space<vmem>>, vector<128x128xf32>
    tpu.vector_store %arg12[%c0_25, %c0_26], %33 {strides = array<i32>} : memref<128x128xf32, #tpu.memory_space<vmem>>, vector<128x128xf32>,
    return
  }
  func.func @transform_0(%arg0: i32) -> (i32, i32) {
    %c0_i32 = arith.constant 0 : i32
    %c0_i32_0 = arith.constant 0 : i32
    return %arg0, %c0_i32 : i32, i32
  }
  func.func @transform_1(%arg0: i32) -> (i32, i32) {
    %c0_i32 = arith.constant 0 : i32
    %c0_i32_0 = arith.constant 0 : i32
    %c0_i32_1 = arith.constant 0 : i32
    return %c0_i32, %c0_i32_0 : i32, i32
  }
  func.func @transform_2(%arg0: i32) -> (i32, i32) {
    %c0_i32 = arith.constant 0 : i32
    %c0_i32_0 = arith.constant 0 : i32
    %c0_i32_1 = arith.constant 0 : i32
    return %c0_i32, %c0_i32_0 : i32, i32
  }
  func.func @transform_3(%arg0: i32) -> (i32, i32) {
    %c0_i32 = arith.constant 0 : i32
    %c0_i32_0 = arith.constant 0 : i32
    %c0_i32_1 = arith.constant 0 : i32
    return %c0_i32, %c0_i32_0 : i32, i32
  }
  func.func @transform_4(%arg0: i32) -> (i32, i32) {
    %c0_i32 = arith.constant 0 : i32
    %c0_i32_0 = arith.constant 0 : i32
    %c0_i32_1 = arith.constant 0 : i32
    return %c0_i32, %c0_i32_0 : i32, i32
  }
  func.func @transform_5(%arg0: i32) -> (i32, i32) {
    %c0_i32 = arith.constant 0 : i32
    %c0_i32_0 = arith.constant 0 : i32
    %c0_i32_1 = arith.constant 0 : i32
    return %c0_i32, %c0_i32_0 : i32, i32
  }
  func.func @transform_6(%arg0: i32) -> (i32, i32) {
    %c0_i32 = arith.constant 0 : i32
    %c0_i32_0 = arith.constant 0 : i32
    %c0_i32_1 = arith.constant 0 : i32
    return %c0_i32, %c0_i32_0 : i32, i32
  }
  func.func @transform_7(%arg0: i32) -> (i32, i32) {
    %c0_i32 = arith.constant 0 : i32
    %c0_i32_0 = arith.constant 0 : i32
    %c0_i32_1 = arith.constant 0 : i32
    return %c0_i32, %c0_i32_0 : i32, i32
  }
  func.func @transform_8(%arg0: i32) -> (i32, i32) {
    %c0_i32 = arith.constant 0 : i32
    %c0_i32_0 = arith.constant 0 : i32
    %c0_i32_1 = arith.constant 0 : i32
    return %c0_i32, %c0_i32_0 : i32, i32
  }
  func.func @transform_9(%arg0: i32) -> (i32, i32) {
    %c0_i32 = arith.constant 0 : i32
    %c0_i32_0 = arith.constant 0 : i32
    %c0_i32_1 = arith.constant 0 : i32
    return %c0_i32, %c0_i32_0 : i32, i32
  }
  func.func @transform_10(%arg0: i32) -> (i32, i32) {
    %c0_i32 = arith.constant 0 : i32
    %c0_i32_0 = arith.constant 0 : i32
    %c0_i32_1 = arith.constant 0 : i32
    return %c0_i32, %c0_i32_0 : i32, i32
  }
  func.func @transform_11(%arg0: i32) -> (i32, i32) {
    %c0_i32 = arith.constant 0 : i32
    %c0_i32_0 = arith.constant 0 : i32
    return %arg0, %c0_i32 : i32, i32
  }
}

</mosaic_0001>

<llo_original>
// kernel: mlp_forward.1
$region0: #{mlp_forward.1}
  #allocation0 [shape = 'u32[]', space=smem, size = 0x4, offset = 0x4, fixed_abs, tag = 'smem constant byte address 0x4 - core index']
  #allocation1 [shape = 'u32[144,128]{1,0:T(1,128)}', space=vmem, size = 0x12000, scoped, tag = 'internal scratch']
  %s0 = inlined_call_operand.vmem [shape: bf16[256,256], index: 0, kind: input, shape index: {}]
  %s1 = inlined_call_operand.vmem [shape: bf16[256,128], index: 1, kind: input, shape index: {}]
  %s2 = inlined_call_operand.vmem [shape: f32[1,128], index: 2, kind: input, shape index: {}]
  %s3 = inlined_call_operand.vmem [shape: f32[1,128], index: 3, kind: input, shape index: {}]
  %s4 = inlined_call_operand.vmem [shape: f32[1,128], index: 4, kind: input, shape index: {}]
  %s5 = inlined_call_operand.vmem [shape: bf16[128,128], index: 5, kind: input, shape index: {}]
  %s6 = inlined_call_operand.vmem [shape: f32[1,128], index: 6, kind: input, shape index: {}]
  %s7 = inlined_call_operand.vmem [shape: f32[1,128], index: 7, kind: input, shape index: {}]
  %s8 = inlined_call_operand.vmem [shape: f32[1,128], index: 8, kind: input, shape index: {}]
  %s9 = inlined_call_operand.vmem [shape: bf16[128,128], index: 9, kind: input, shape index: {}]
  %s10 = inlined_call_operand.vmem [shape: f32[1,128], index: 10, kind: input, shape index: {}]
  %s11 = inlined_call_operand.vmem [shape: f32[256,128], index: 11, kind: output, shape index: {}]
  %s12 = sld [smem:[#allocation0]]
  $region77: #{mlp_forward.1} parent=0
    _
  %s14 = ssub.s32 1, %s12
  %s15 = scalar_select 0, %s14, %s12
  loop: start=0, step=1, limit=4
  $region2: #{mlp_forward.1} parent=0 // loop_pre_header
    _
  $region3: #{mlp_forward.1} parent=0 // loop_header
    %s17 = sphi 0, %s21
    %p18 = scmp.ge.s32.totalorder %s17, 4
    %s27 = sphi 0, %s29
    %s30 = sphi 0, %s27
    %s31 = sphi 0, %s30
    %s47 = sphi 0, %s31
    %s51 = sphi 0, %s51
    %s53 = sphi 0, %s51
    %s54 = sphi 0, %s53
    %s68 = sphi 0, %s54
    %s72 = sphi 0, %s72
    %s74 = sphi 0, %s72
    %s75 = sphi 0, %s74
    %s89 = sphi 0, %s75
    %s93 = sphi 0, %s93
    %s95 = sphi 0, %s93
    %s96 = sphi 0, %s95
    %s110 = sphi 0, %s96
    %s114 = sphi 0, %s114
    %s116 = sphi 0, %s114
    %s117 = sphi 0, %s116
    %s131 = sphi 0, %s117
    %s135 = sphi 0, %s135
    %s137 = sphi 0, %s135
    %s138 = sphi 0, %s137
    %s152 = sphi 0, %s138
    %s156 = sphi 0, %s156
    %s158 = sphi 0, %s156
    %s159 = sphi 0, %s158
    %s173 = sphi 0, %s159
    %s177 = sphi 0, %s177
    %s179 = sphi 0, %s177
    %s180 = sphi 0, %s179
    %s194 = sphi 0, %s180
    %s198 = sphi 0, %s198
    %s200 = sphi 0, %s198
    %s201 = sphi 0, %s200
    %s215 = sphi 0, %s201
    %s219 = sphi 0, %s219
    %s221 = sphi 0, %s219
    %s222 = sphi 0, %s221
    %s236 = sphi 0, %s222
    %s240 = sphi 0, %s240
    %s242 = sphi 0, %s240
    %s243 = sphi 0, %s242
    %s257 = sphi 0, %s243
    %s263 = sphi 0, %s265
    %s266 = sphi 0, %s263
    %s267 = sphi 0, %s266
    %s283 = sphi 0, %s267
  $region4: #{mlp_forward.1} parent=0 // loop_header_branch
    %20 = sbr.rel (%p18) target = $region8
  $region5: #{mlp_forward.1} parent=0 // loop_body
    %s22 = ssub.s32 %s17, 1
    %s23 = ssub.s32 %s17, 2
    %s24 = sadd.s32 %s17, 1
    %s25 = ssub.s32 %s17, %s24
    %p26 = scmp.eq.s32.totalorder %s25, 0
    %s28 = sadd.s32 %s27, 1
    %s29 = scalar_select %p26, %s27, %s28
    %p32 = pneg %p26
    %p33 = scmp.eq.s32.totalorder %s17, 1
    %p34 = por %p32, %p33
    %p35 = scmp.ne.s32.totalorder %s27, %s30
    %p36 = scmp.eq.s32.totalorder %s17, 0
    %p37 = por %p35, %p36
    %p38 = scmp.ne.s32.totalorder %s27, %s30
    %p39 = scmp.eq.s32.totalorder %s22, 1
    %p40 = por %p38, %p39
    %p41 = scmp.ne.s32.totalorder %s30, %s31
    %p42 = scmp.eq.s32.totalorder %s22, 0
    %p43 = por %p41, %p42
    %p44 = scmp.ne.s32.totalorder %s30, %s31
    %p45 = scmp.eq.s32.totalorder %s23, 1
    %p46 = por %p44, %p45
    %p48 = scmp.ne.s32.totalorder %s31, %s47
    %p49 = scmp.eq.s32.totalorder %s23, 0
    %p50 = por %p48, %p49
    %s52 = sadd.s32 %s51, 1
    %p55 = scmp.eq.s32.totalorder %s17, 1
    %p56 = scmp.ne.s32.totalorder %s51, %s53
    %p57 = scmp.eq.s32.totalorder %s17, 0
    %p58 = por %p56, %p57
    %p59 = scmp.ne.s32.totalorder %s51, %s53
    %p60 = scmp.eq.s32.totalorder %s22, 1
    %p61 = por %p59, %p60
    %p62 = scmp.ne.s32.totalorder %s53, %s54
    %p63 = scmp.eq.s32.totalorder %s22, 0
    %p64 = por %p62, %p63
    %p65 = scmp.ne.s32.totalorder %s53, %s54
    %p66 = scmp.eq.s32.totalorder %s23, 1
    %p67 = por %p65, %p66
    %p69 = scmp.ne.s32.totalorder %s54, %s68
    %p70 = scmp.eq.s32.totalorder %s23, 0
    %p71 = por %p69, %p70
    %s73 = sadd.s32 %s72, 1
    %p76 = scmp.eq.s32.totalorder %s17, 1
    %p77 = scmp.ne.s32.totalorder %s72, %s74
    %p78 = scmp.eq.s32.totalorder %s17, 0
    %p79 = por %p77, %p78
    %p80 = scmp.ne.s32.totalorder %s72, %s74
    %p81 = scmp.eq.s32.totalorder %s22, 1
    %p82 = por %p80, %p81
    %p83 = scmp.ne.s32.totalorder %s74, %s75
    %p84 = scmp.eq.s32.totalorder %s22, 0
    %p85 = por %p83, %p84
    %p86 = scmp.ne.s32.totalorder %s74, %s75
    %p87 = scmp.eq.s32.totalorder %s23, 1
    %p88 = por %p86, %p87
    %p90 = scmp.ne.s32.totalorder %s75, %s89
    %p91 = scmp.eq.s32.totalorder %s23, 0
    %p92 = por %p90, %p91
    %s94 = sadd.s32 %s93, 1
    %p97 = scmp.eq.s32.totalorder %s17, 1
    %p98 = scmp.ne.s32.totalorder %s93, %s95
    %p99 = scmp.eq.s32.totalorder %s17, 0
    %p100 = por %p98, %p99
    %p101 = scmp.ne.s32.totalorder %s93, %s95
    %p102 = scmp.eq.s32.totalorder %s22, 1
    %p103 = por %p101, %p102
    %p104 = scmp.ne.s32.totalorder %s95, %s96
    %p105 = scmp.eq.s32.totalorder %s22, 0
    %p106 = por %p104, %p105
    %p107 = scmp.ne.s32.totalorder %s95, %s96
    %p108 = scmp.eq.s32.totalorder %s23, 1
    %p109 = por %p107, %p108
    %p111 = scmp.ne.s32.totalorder %s96, %s110
    %p112 = scmp.eq.s32.totalorder %s23, 0
    %p113 = por %p111, %p112
    %s115 = sadd.s32 %s114, 1
    %p118 = scmp.eq.s32.totalorder %s17, 1
    %p119 = scmp.ne.s32.totalorder %s114, %s116
    %p120 = scmp.eq.s32.totalorder %s17, 0
    %p121 = por %p119, %p120
    %p122 = scmp.ne.s32.totalorder %s114, %s116
    %p123 = scmp.eq.s32.totalorder %s22, 1
    %p124 = por %p122, %p123
    %p125 = scmp.ne.s32.totalorder %s116, %s117
    %p126 = scmp.eq.s32.totalorder %s22, 0
    %p127 = por %p125, %p126
    %p128 = scmp.ne.s32.totalorder %s116, %s117
    %p129 = scmp.eq.s32.totalorder %s23, 1
    %p130 = por %p128, %p129
    %p132 = scmp.ne.s32.totalorder %s117, %s131
    %p133 = scmp.eq.s32.totalorder %s23, 0
    %p134 = por %p132, %p133
    %s136 = sadd.s32 %s135, 1
    %p139 = scmp.eq.s32.totalorder %s17, 1
    %p140 = scmp.ne.s32.totalorder %s135, %s137
    %p141 = scmp.eq.s32.totalorder %s17, 0
    %p142 = por %p140, %p141
    %p143 = scmp.ne.s32.totalorder %s135, %s137
    %p144 = scmp.eq.s32.totalorder %s22, 1
    %p145 = por %p143, %p144
    %p146 = scmp.ne.s32.totalorder %s137, %s138
    %p147 = scmp.eq.s32.totalorder %s22, 0
    %p148 = por %p146, %p147
    %p149 = scmp.ne.s32.totalorder %s137, %s138
    %p150 = scmp.eq.s32.totalorder %s23, 1
    %p151 = por %p149, %p150
    %p153 = scmp.ne.s32.totalorder %s138, %s152
    %p154 = scmp.eq.s32.totalorder %s23, 0
    %p155 = por %p153, %p154
    %s157 = sadd.s32 %s156, 1
    %p160 = scmp.eq.s32.totalorder %s17, 1
    %p161 = scmp.ne.s32.totalorder %s156, %s158
    %p162 = scmp.eq.s32.totalorder %s17, 0
    %p163 = por %p161, %p162
    %p164 = scmp.ne.s32.totalorder %s156, %s158
    %p165 = scmp.eq.s32.totalorder %s22, 1
    %p166 = por %p164, %p165
    %p167 = scmp.ne.s32.totalorder %s158, %s159
    %p168 = scmp.eq.s32.totalorder %s22, 0
    %p169 = por %p167, %p168
    %p170 = scmp.ne.s32.totalorder %s158, %s159
    %p171 = scmp.eq.s32.totalorder %s23, 1
    %p172 = por %p170, %p171
    %p174 = scmp.ne.s32.totalorder %s159, %s173
    %p175 = scmp.eq.s32.totalorder %s23, 0
    %p176 = por %p174, %p175
    %s178 = sadd.s32 %s177, 1
    %p181 = scmp.eq.s32.totalorder %s17, 1
    %p182 = scmp.ne.s32.totalorder %s177, %s179
    %p183 = scmp.eq.s32.totalorder %s17, 0
    %p184 = por %p182, %p183
    %p185 = scmp.ne.s32.totalorder %s177, %s179
    %p186 = scmp.eq.s32.totalorder %s22, 1
    %p187 = por %p185, %p186
    %p188 = scmp.ne.s32.totalorder %s179, %s180
    %p189 = scmp.eq.s32.totalorder %s22, 0
    %p190 = por %p188, %p189
    %p191 = scmp.ne.s32.totalorder %s179, %s180
    %p192 = scmp.eq.s32.totalorder %s23, 1
    %p193 = por %p191, %p192
    %p195 = scmp.ne.s32.totalorder %s180, %s194
    %p196 = scmp.eq.s32.totalorder %s23, 0
    %p197 = por %p195, %p196
    %s199 = sadd.s32 %s198, 1
    %p202 = scmp.eq.s32.totalorder %s17, 1
    %p203 = scmp.ne.s32.totalorder %s198, %s200
    %p204 = scmp.eq.s32.totalorder %s17, 0
    %p205 = por %p203, %p204
    %p206 = scmp.ne.s32.totalorder %s198, %s200
    %p207 = scmp.eq.s32.totalorder %s22, 1
    %p208 = por %p206, %p207
    %p209 = scmp.ne.s32.totalorder %s200, %s201
    %p210 = scmp.eq.s32.totalorder %s22, 0
    %p211 = por %p209, %p210
    %p212 = scmp.ne.s32.totalorder %s200, %s201
    %p213 = scmp.eq.s32.totalorder %s23, 1
    %p214 = por %p212, %p213
    %p216 = scmp.ne.s32.totalorder %s201, %s215
    %p217 = scmp.eq.s32.totalorder %s23, 0
    %p218 = por %p216, %p217
    %s220 = sadd.s32 %s219, 1
    %p223 = scmp.eq.s32.totalorder %s17, 1
    %p224 = scmp.ne.s32.totalorder %s219, %s221
    %p225 = scmp.eq.s32.totalorder %s17, 0
    %p226 = por %p224, %p225
    %p227 = scmp.ne.s32.totalorder %s219, %s221
    %p228 = scmp.eq.s32.totalorder %s22, 1
    %p229 = por %p227, %p228
    %p230 = scmp.ne.s32.totalorder %s221, %s222
    %p231 = scmp.eq.s32.totalorder %s22, 0
    %p232 = por %p230, %p231
    %p233 = scmp.ne.s32.totalorder %s221, %s222
    %p234 = scmp.eq.s32.totalorder %s23, 1
    %p235 = por %p233, %p234
    %p237 = scmp.ne.s32.totalorder %s222, %s236
    %p238 = scmp.eq.s32.totalorder %s23, 0
    %p239 = por %p237, %p238
    %s241 = sadd.s32 %s240, 1
    %p244 = scmp.eq.s32.totalorder %s17, 1
    %p245 = scmp.ne.s32.totalorder %s240, %s242
    %p246 = scmp.eq.s32.totalorder %s17, 0
    %p247 = por %p245, %p246
    %p248 = scmp.ne.s32.totalorder %s240, %s242
    %p249 = scmp.eq.s32.totalorder %s22, 1
    %p250 = por %p248, %p249
    %p251 = scmp.ne.s32.totalorder %s242, %s243
    %p252 = scmp.eq.s32.totalorder %s22, 0
    %p253 = por %p251, %p252
    %p254 = scmp.ne.s32.totalorder %s242, %s243
    %p255 = scmp.eq.s32.totalorder %s23, 1
    %p256 = por %p254, %p255
    %p258 = scmp.ne.s32.totalorder %s243, %s257
    %p259 = scmp.eq.s32.totalorder %s23, 0
    %p260 = por %p258, %p259
    %s261 = ssub.s32 %s17, %s24
    %p262 = scmp.eq.s32.totalorder %s261, 0
    %s264 = sadd.s32 %s263, 1
    %s265 = scalar_select %p262, %s263, %s264
    %p268 = pneg %p262
    %p269 = scmp.eq.s32.totalorder %s17, 1
    %p270 = por %p268, %p269
    %p271 = scmp.ne.s32.totalorder %s263, %s266
    %p272 = scmp.eq.s32.totalorder %s17, 0
    %p273 = por %p271, %p272
    %p274 = scmp.ne.s32.totalorder %s263, %s266
    %p275 = scmp.eq.s32.totalorder %s22, 1
    %p276 = por %p274, %p275
    %p277 = scmp.ne.s32.totalorder %s266, %s267
    %p278 = scmp.eq.s32.totalorder %s22, 0
    %p279 = por %p277, %p278
    %p280 = scmp.ne.s32.totalorder %s266, %s267
    %p281 = scmp.eq.s32.totalorder %s23, 1
    %p282 = por %p280, %p281
    %p284 = scmp.ne.s32.totalorder %s267, %s283
    %p285 = scmp.eq.s32.totalorder %s23, 0
    %p286 = por %p284, %p285
    %p287 = scmp.le.s32.totalorder 1, %s17
    %p288 = scmp.lt.s32.totalorder %s17, 3
    %p289 = pnand %p287, %p288
    %p290 = pneg %p289
    // Predicated region
    $region9: #{mlp_forward.1} parent=5 // pred_check
      _
    $region10: #{mlp_forward.1} parent=5 // pred_check_branch
      %292 = sbr.rel (%p289) target = $region12
    $region11: #{mlp_forward.1} parent=5 // pred_region
      %s293 = ssub.s32 %s17, 1
      // Predicated region
      $region13: #{mlp_forward.1} parent=11 // pred_check
        %p294 = pneg %p64
      $region14: #{mlp_forward.1} parent=11 // pred_check_branch
        %296 = sbr.rel (%p294) target = $region16
      $region15: #{mlp_forward.1} parent=11 // pred_region
        _
      $region16: #{mlp_forward.1} parent=11 // pred_fallthru
        _
      // Predicated region
      $region17: #{mlp_forward.1} parent=11 // pred_check
        %p297 = pneg %p85
      $region18: #{mlp_forward.1} parent=11 // pred_check_branch
        %299 = sbr.rel (%p297) target = $region20
      $region19: #{mlp_forward.1} parent=11 // pred_region
        _
      $region20: #{mlp_forward.1} parent=11 // pred_fallthru
        _
      // Predicated region
      $region21: #{mlp_forward.1} parent=11 // pred_check
        %p300 = pneg %p106
      $region22: #{mlp_forward.1} parent=11 // pred_check_branch
        %302 = sbr.rel (%p300) target = $region24
      $region23: #{mlp_forward.1} parent=11 // pred_region
        _
      $region24: #{mlp_forward.1} parent=11 // pred_fallthru
        _
      // Predicated region
      $region25: #{mlp_forward.1} parent=11 // pred_check
        %p303 = pneg %p127
      $region26: #{mlp_forward.1} parent=11 // pred_check_branch
        %305 = sbr.rel (%p303) target = $region28
      $region27: #{mlp_forward.1} parent=11 // pred_region
        _
      $region28: #{mlp_forward.1} parent=11 // pred_fallthru
        _
      // Predicated region
      $region29: #{mlp_forward.1} parent=11 // pred_check
        %p306 = pneg %p148
      $region30: #{mlp_forward.1} parent=11 // pred_check_branch
        %308 = sbr.rel (%p306) target = $region32
      $region31: #{mlp_forward.1} parent=11 // pred_region
        _
      $region32: #{mlp_forward.1} parent=11 // pred_fallthru
        _
      // Predicated region
      $region33: #{mlp_forward.1} parent=11 // pred_check
        %p309 = pneg %p169
      $region34: #{mlp_forward.1} parent=11 // pred_check_branch
        %311 = sbr.rel (%p309) target = $region36
      $region35: #{mlp_forward.1} parent=11 // pred_region
        _
      $region36: #{mlp_forward.1} parent=11 // pred_fallthru
        _
      // Predicated region
      $region37: #{mlp_forward.1} parent=11 // pred_check
        %p312 = pneg %p190
      $region38: #{mlp_forward.1} parent=11 // pred_check_branch
        %314 = sbr.rel (%p312) target = $region40
      $region39: #{mlp_forward.1} parent=11 // pred_region
        _
      $region40: #{mlp_forward.1} parent=11 // pred_fallthru
        _
      // Predicated region
      $region41: #{mlp_forward.1} parent=11 // pred_check
        %p315 = pneg %p211
      $region42: #{mlp_forward.1} parent=11 // pred_check_branch
        %317 = sbr.rel (%p315) target = $region44
      $region43: #{mlp_forward.1} parent=11 // pred_region
        _
      $region44: #{mlp_forward.1} parent=11 // pred_fallthru
        _
      // Predicated region
      $region45: #{mlp_forward.1} parent=11 // pred_check
        %p318 = pneg %p232
      $region46: #{mlp_forward.1} parent=11 // pred_check_branch
        %320 = sbr.rel (%p318) target = $region48
      $region47: #{mlp_forward.1} parent=11 // pred_region
        _
      $region48: #{mlp_forward.1} parent=11 // pred_fallthru
        _
      // Predicated region
      $region49: #{mlp_forward.1} parent=11 // pred_check
        %p321 = pneg %p253
      $region50: #{mlp_forward.1} parent=11 // pred_check_branch
        %323 = sbr.rel (%p321) target = $region52
      $region51: #{mlp_forward.1} parent=11 // pred_region
        _
      $region52: #{mlp_forward.1} parent=11 // pred_fallthru
        _
    $region12: #{mlp_forward.1} parent=5 // pred_fallthru
      _
    %p324 = scmp.lt.s32.totalorder %s17, 2
    // Predicated region
    $region53: #{mlp_forward.1} parent=5 // pred_check
      %p325 = pneg %p324
    $region54: #{mlp_forward.1} parent=5 // pred_check_branch
      %327 = sbr.rel (%p325) target = $region56
    $region55: #{mlp_forward.1} parent=5 // pred_region
      // Predicated region
      $region57: #{mlp_forward.1} parent=55 // pred_check
        %p328 = pneg %p37
      $region58: #{mlp_forward.1} parent=55 // pred_check_branch
        %330 = sbr.rel (%p328) target = $region60
      $region59: #{mlp_forward.1} parent=55 // pred_region
        %s331 = smul.u32 16, %s17
        %p332 = scmp.lt.s32.totalorder %s331, 31
        %s333 = scalar_select %p332, %s331, 31
        %s334 = smul.addr %s333, 2
        %s335 = smul.addr %s334, 4
        %s336 = scalar_lea.vmem %s0, %s335
        %s337 = smul.u32 16, %s17
      $region60: #{mlp_forward.1} parent=55 // pred_fallthru
        _
    $region56: #{mlp_forward.1} parent=5 // pred_fallthru
      _
    %p338 = scmp.le.s32.totalorder 1, %s17
    %p339 = scmp.lt.s32.totalorder %s17, 3
    %p340 = pnand %p338, %p339
    %p341 = pneg %p340
    // Predicated region
    $region61: #{mlp_forward.1} parent=5 // pred_check
      _
    $region62: #{mlp_forward.1} parent=5 // pred_check_branch
      %343 = sbr.rel (%p340) target = $region64
    $region63: #{mlp_forward.1} parent=5 // pred_region
      %s344 = ssub.s32 %s17, 1
      %s345 = smul.u32 16, %s22
      %p346 = scmp.lt.s32.totalorder %s345, 31
      %s347 = scalar_select %p346, %s345, 31
      %s348 = smul.addr %s347, 2
      %s349 = smul.addr %s348, 4
      %s350 = scalar_lea.vmem %s0, %s349
      %p351 = pneg %p43
      %p352 = pneg %p40
      %p353 = pneg %p64
      %p354 = pneg %p61
      %p355 = pneg %p85
      %p356 = pneg %p82
      %p357 = pneg %p106
      %p358 = pneg %p103
      %p359 = pneg %p127
      %p360 = pneg %p124
      %p361 = pneg %p148
      %p362 = pneg %p145
      %p363 = pneg %p169
      %p364 = pneg %p166
      %p365 = pneg %p190
      %p366 = pneg %p187
      %p367 = pneg %p211
      %p368 = pneg %p208
      %p369 = pneg %p232
      %p370 = pneg %p229
      %p371 = pneg %p253
      %p372 = pneg %p250
      %p373 = pneg %p279
      %p374 = pneg %p276
      %s375 = smul.u32 16, %s22
      %p376 = scmp.lt.s32.totalorder %s375, 31
      %s377 = scalar_select %p376, %s375, 31
      %s378 = smul.addr %s377, 8
      %s379 = scalar_lea.vmem %s11, %s378
      %s380 = smul.u32 16, %s22
      %p381 = scmp.lt.s32.totalorder %s380, 31
      %s382 = scalar_select %p381, %s380, 31
      %s383 = smul.addr %s382, 2
      %s384 = smul.addr %s383, 4
      %s385 = scalar_lea.vmem %s0, %s384
      %s386 = smul.u32 16, %s22
      %s387 = smul.u32 16, %s22
      %p388 = scmp.lt.s32.totalorder %s387, 31
      %s389 = scalar_select %p388, %s387, 31
      %s390 = smul.addr %s389, 8
      %s391 = scalar_lea.vmem %s11, %s390
      %s392 = smul.u32 16, %s22
      %v394 = vld [vmem:[%s385] sm:$0xff]
      %v395 = vld [vmem:[%s385 + $0x8] sm:$0xff]
      %v396 = vld [vmem:[%s385 + $0x10] sm:$0xff]
      %v397 = vld [vmem:[%s385 + $0x18] sm:$0xff]
      %v398 = vld [vmem:[%s385 + $0x20] sm:$0xff]
      %v399 = vld [vmem:[%s385 + $0x28] sm:$0xff]
      %v400 = vld [vmem:[%s385 + $0x30] sm:$0xff]
      %v401 = vld [vmem:[%s385 + $0x38] sm:$0xff]
      %v402 = vld [vmem:[%s385 + $0x40] sm:$0xff]
      %v403 = vld [vmem:[%s385 + $0x48] sm:$0xff]
      %v404 = vld [vmem:[%s385 + $0x50] sm:$0xff]
      %v405 = vld [vmem:[%s385 + $0x58] sm:$0xff]
      %v406 = vld [vmem:[%s385 + $0x60] sm:$0xff]
      %v407 = vld [vmem:[%s385 + $0x68] sm:$0xff]
      %v408 = vld [vmem:[%s385 + $0x70] sm:$0xff]
      %v409 = vld [vmem:[%s385 + $0x78] sm:$0xff]
      %v410 = vld [vmem:[%s1] sm:$0xf]
      %v411 = vld [vmem:[%s1 + $0x4] sm:$0xf]
      %v412 = vld [vmem:[%s1 + $0x8] sm:$0xf]
      %v413 = vld [vmem:[%s1 + $0xc] sm:$0xf]
      %v414 = vld [vmem:[%s1 + $0x10] sm:$0xf]
      %v415 = vld [vmem:[%s1 + $0x14] sm:$0xf]
      %v416 = vld [vmem:[%s1 + $0x18] sm:$0xf]
      %v417 = vld [vmem:[%s1 + $0x1c] sm:$0xf]
      %v418 = vld [vmem:[%s1 + $0x20] sm:$0xf]
      %v419 = vld [vmem:[%s1 + $0x24] sm:$0xf]
      %v420 = vld [vmem:[%s1 + $0x28] sm:$0xf]
      %v421 = vld [vmem:[%s1 + $0x2c] sm:$0xf]
      %v422 = vld [vmem:[%s1 + $0x30] sm:$0xf]
      %v423 = vld [vmem:[%s1 + $0x34] sm:$0xf]
      %v424 = vld [vmem:[%s1 + $0x38] sm:$0xf]
      %v425 = vld [vmem:[%s1 + $0x3c] sm:$0xf]
      %v426 = vld [vmem:[%s1 + $0x40] sm:$0xf]
      %v427 = vld [vmem:[%s1 + $0x44] sm:$0xf]
      %v428 = vld [vmem:[%s1 + $0x48] sm:$0xf]
      %v429 = vld [vmem:[%s1 + $0x4c] sm:$0xf]
      %v430 = vld [vmem:[%s1 + $0x50] sm:$0xf]
      %v431 = vld [vmem:[%s1 + $0x54] sm:$0xf]
      %v432 = vld [vmem:[%s1 + $0x58] sm:$0xf]
      %v433 = vld [vmem:[%s1 + $0x5c] sm:$0xf]
      %v434 = vld [vmem:[%s1 + $0x60] sm:$0xf]
      %v435 = vld [vmem:[%s1 + $0x64] sm:$0xf]
      %v436 = vld [vmem:[%s1 + $0x68] sm:$0xf]
      %v437 = vld [vmem:[%s1 + $0x6c] sm:$0xf]
      %v438 = vld [vmem:[%s1 + $0x70] sm:$0xf]
      %v439 = vld [vmem:[%s1 + $0x74] sm:$0xf]
      %v440 = vld [vmem:[%s1 + $0x78] sm:$0xf]
      %v441 = vld [vmem:[%s1 + $0x7c] sm:$0xf]
      %v442 = vld [vmem:[%s2] sm:$0x1]
      %v444 = vlaneseq
      %v445 = vshrl.u32 %v444, 7
      %v446 = vsub.s32 0, %v445
      %v447 = vrot.slane %v442, %v446
      %v465 = vunpack.c.l.b16 %v394
      %v466 = vunpack.c.h.b16 %v394
      %v467 = vunpack.c.l.b16 %v395
      %v468 = vunpack.c.h.b16 %v395
      %v469 = vunpack.c.l.b16 %v396
      %v470 = vunpack.c.h.b16 %v396
      %v471 = vunpack.c.l.b16 %v397
      %v472 = vunpack.c.h.b16 %v397
      %v473 = vunpack.c.l.b16 %v398
      %v474 = vunpack.c.h.b16 %v398
      %v475 = vunpack.c.l.b16 %v399
      %v476 = vunpack.c.h.b16 %v399
      %v477 = vunpack.c.l.b16 %v400
      %v478 = vunpack.c.h.b16 %v400
      %v479 = vunpack.c.l.b16 %v401
      %v480 = vunpack.c.h.b16 %v401
      %v481 = vunpack.c.l.b16 %v402
      %v482 = vunpack.c.h.b16 %v402
      %v483 = vunpack.c.l.b16 %v403
      %v484 = vunpack.c.h.b16 %v403
      %v485 = vunpack.c.l.b16 %v404
      %v486 = vunpack.c.h.b16 %v404
      %v487 = vunpack.c.l.b16 %v405
      %v488 = vunpack.c.h.b16 %v405
      %v489 = vunpack.c.l.b16 %v406
      %v490 = vunpack.c.h.b16 %v406
      %v491 = vunpack.c.l.b16 %v407
      %v492 = vunpack.c.h.b16 %v407
      %v493 = vunpack.c.l.b16 %v408
      %v494 = vunpack.c.h.b16 %v408
      %v495 = vunpack.c.l.b16 %v409
      %v496 = vunpack.c.h.b16 %v409
      %v497 = vpack.c.b16 %v467, %v465
      %v498 = vpack.c.b16 %v468, %v466
      %v499 = vpack.c.b16 %v471, %v469
      %v500 = vpack.c.b16 %v472, %v470
      %v501 = vpack.c.b16 %v475, %v473
      %v502 = vpack.c.b16 %v476, %v474
      %v503 = vpack.c.b16 %v479, %v477
      %v504 = vpack.c.b16 %v480, %v478
      %v505 = vpack.c.b16 %v483, %v481
      %v506 = vpack.c.b16 %v484, %v482
      %v507 = vpack.c.b16 %v487, %v485
      %v508 = vpack.c.b16 %v488, %v486
      %v509 = vpack.c.b16 %v491, %v489
      %v510 = vpack.c.b16 %v492, %v490
      %v511 = vpack.c.b16 %v495, %v493
      %v512 = vpack.c.b16 %v496, %v494
      %v561 = vunpack.c.l.b16 %v410
      %v562 = vunpack.c.l.b16 %v411
      %v563 = vunpack.c.l.b16 %v412
      %v564 = vunpack.c.l.b16 %v413
      %v565 = vunpack.c.l.b16 %v414
      %v566 = vunpack.c.l.b16 %v415
      %v567 = vunpack.c.l.b16 %v416
      %v568 = vunpack.c.l.b16 %v417
      %v569 = vunpack.c.l.b16 %v418
      %v570 = vunpack.c.l.b16 %v419
      %v571 = vunpack.c.l.b16 %v420
      %v572 = vunpack.c.l.b16 %v421
      %v573 = vunpack.c.l.b16 %v422
      %v574 = vunpack.c.l.b16 %v423
      %v575 = vunpack.c.l.b16 %v424
      %v576 = vunpack.c.l.b16 %v425
      %v577 = vunpack.c.l.b16 %v426
      %v578 = vunpack.c.l.b16 %v427
      %v579 = vunpack.c.l.b16 %v428
      %v580 = vunpack.c.l.b16 %v429
      %v581 = vunpack.c.l.b16 %v430
      %v582 = vunpack.c.l.b16 %v431
      %v583 = vunpack.c.l.b16 %v432
      %v584 = vunpack.c.l.b16 %v433
      %v585 = vunpack.c.l.b16 %v434
      %v586 = vunpack.c.l.b16 %v435
      %v587 = vunpack.c.l.b16 %v436
      %v588 = vunpack.c.l.b16 %v437
      %v589 = vunpack.c.l.b16 %v438
      %v590 = vunpack.c.l.b16 %v439
      %v591 = vunpack.c.l.b16 %v440
      %v592 = vunpack.c.l.b16 %v441
      %v593 = vpack.c.b16 %v562, %v561
      %v594 = vpack.c.b16 %v564, %v563
      %v595 = vpack.c.b16 %v566, %v565
      %v596 = vpack.c.b16 %v568, %v567
      %v597 = vpack.c.b16 %v570, %v569
      %v598 = vpack.c.b16 %v572, %v571
      %v599 = vpack.c.b16 %v574, %v573
      %v600 = vpack.c.b16 %v576, %v575
      %v601 = vpack.c.b16 %v578, %v577
      %v602 = vpack.c.b16 %v580, %v579
      %v603 = vpack.c.b16 %v582, %v581
      %v604 = vpack.c.b16 %v584, %v583
      %v605 = vpack.c.b16 %v586, %v585
      %v606 = vpack.c.b16 %v588, %v587
      %v607 = vpack.c.b16 %v590, %v589
      %v608 = vpack.c.b16 %v592, %v591
      %625 = vmatprep.subr.bf16.mxu0 0
      %626 = vmatpush1.bf16.msra.mxu0 %v600
      %627 = vmatprep.subr.bf16.mxu0 0
      %628 = vmatpush1.bf16.msra.mxu0 %v599
      %629 = vmatprep.subr.bf16.mxu0 0
      %630 = vmatpush1.bf16.msra.mxu0 %v598
      %631 = vmatprep.subr.bf16.mxu0 0
      %632 = vmatpush1.bf16.msra.mxu0 %v597
      %633 = vmatprep.subr.bf16.mxu0 0
      %634 = vmatpush1.bf16.msra.mxu0 %v596
      %635 = vmatprep.subr.bf16.mxu0 0
      %636 = vmatpush1.bf16.msra.mxu0 %v595
      %637 = vmatprep.subr.bf16.mxu0 0
      %638 = vmatpush1.bf16.msra.mxu0 %v594
      %639 = vmatprep.subr.bf16.mxu0 0
      %640 = vmatpush1.bf16.msra.mxu0 %v593
      %641 = vmatprep.subr.bf16.mxu0 0
      %642 = vmatpush2.bf16.msra.mxu0 %v608
      %643 = vmatprep.subr.bf16.mxu0 0
      %644 = vmatpush2.bf16.msra.mxu0 %v607
      %645 = vmatprep.subr.bf16.mxu0 0
      %646 = vmatpush2.bf16.msra.mxu0 %v606
      %647 = vmatprep.subr.bf16.mxu0 0
      %648 = vmatpush2.bf16.msra.mxu0 %v605
      %649 = vmatprep.subr.bf16.mxu0 0
      %650 = vmatpush2.bf16.msra.mxu0 %v604
      %651 = vmatprep.subr.bf16.mxu0 0
      %652 = vmatpush2.bf16.msra.mxu0 %v603
      %653 = vmatprep.subr.bf16.mxu0 0
      %654 = vmatpush2.bf16.msra.mxu0 %v602
      %655 = vmatprep.subr.bf16.mxu0 0
      %656 = vmatpush2.bf16.msra.mxu0 %v601
      %657 = vmatprep.mubr.bf16.mxu0 %v498
      %658 = vmatmul.mubr.bf16.gmra.mxu0 %v497
      %v659 = vpop.f32.mrf.mxu0
      %v660 = vadd.f32 %v447, %v659
      %v661 = vpop.f32.mrf.mxu0
      %v662 = vpop.f32.mrf.mxu0
      %v663 = vadd.f32 %v447, %v662
      %v664 = vpop.f32.mrf.mxu0
      %665 = vmatprep.mubr.bf16.mxu0 %v500
      %666 = vmatmul.mubr.bf16.gmra.mxu0 %v499
      %v667 = vpop.f32.mrf.mxu0
      %v668 = vadd.f32 %v447, %v667
      %v669 = vpop.f32.mrf.mxu0
      %v670 = vpop.f32.mrf.mxu0
      %v671 = vadd.f32 %v447, %v670
      %v672 = vpop.f32.mrf.mxu0
      %673 = vmatprep.mubr.bf16.mxu0 %v502
      %674 = vmatmul.mubr.bf16.gmra.mxu0 %v501
      %v675 = vpop.f32.mrf.mxu0
      %v676 = vadd.f32 %v447, %v675
      %v677 = vpop.f32.mrf.mxu0
      %v678 = vpop.f32.mrf.mxu0
      %v679 = vadd.f32 %v447, %v678
      %v680 = vpop.f32.mrf.mxu0
      %681 = vmatprep.mubr.bf16.mxu0 %v504
      %682 = vmatmul.mubr.bf16.gmra.mxu0 %v503
      %v683 = vpop.f32.mrf.mxu0
      %v684 = vadd.f32 %v447, %v683
      %v685 = vpop.f32.mrf.mxu0
      %v686 = vpop.f32.mrf.mxu0
      %v687 = vadd.f32 %v447, %v686
      %v688 = vpop.f32.mrf.mxu0
      %689 = vmatprep.mubr.bf16.mxu0 %v506
      %690 = vmatmul.mubr.bf16.gmra.mxu0 %v505
      %v691 = vpop.f32.mrf.mxu0
      %v692 = vadd.f32 %v447, %v691
      %v693 = vpop.f32.mrf.mxu0
      %v694 = vpop.f32.mrf.mxu0
      %v695 = vadd.f32 %v447, %v694
      %v696 = vpop.f32.mrf.mxu0
      %697 = vmatprep.mubr.bf16.mxu0 %v508
      %698 = vmatmul.mubr.bf16.gmra.mxu0 %v507
      %v699 = vpop.f32.mrf.mxu0
      %v700 = vadd.f32 %v447, %v699
      %v701 = vpop.f32.mrf.mxu0
      %v702 = vpop.f32.mrf.mxu0
      %v703 = vadd.f32 %v447, %v702
      %v704 = vpop.f32.mrf.mxu0
      %705 = vmatprep.mubr.bf16.mxu0 %v510
      %706 = vmatmul.mubr.bf16.gmra.mxu0 %v509
      %v707 = vpop.f32.mrf.mxu0
      %v708 = vadd.f32 %v447, %v707
      %v709 = vpop.f32.mrf.mxu0
      %v710 = vpop.f32.mrf.mxu0
      %v711 = vadd.f32 %v447, %v710
      %v712 = vpop.f32.mrf.mxu0
      %713 = vmatprep.mubr.bf16.mxu0 %v512
      %714 = vmatmul.mubr.bf16.gmra.mxu0 %v511
      %v715 = vpop.f32.mrf.mxu0
      %v716 = vadd.f32 %v447, %v715
      %v717 = vpop.f32.mrf.mxu0
      %v718 = vpop.f32.mrf.mxu0
      %v719 = vadd.f32 %v447, %v718
      %v720 = vpop.f32.mrf.mxu0
      %721 = vdwg.mxu0
      %v722 = vmax.f32 %v660, 0.0
      %v723 = vmax.f32 %v663, 0.0
      %v724 = vmax.f32 %v668, 0.0
      %v725 = vmax.f32 %v671, 0.0
      %v726 = vmax.f32 %v676, 0.0
      %v727 = vmax.f32 %v679, 0.0
      %v728 = vmax.f32 %v684, 0.0
      %v729 = vmax.f32 %v687, 0.0
      %v730 = vmax.f32 %v692, 0.0
      %v731 = vmax.f32 %v695, 0.0
      %v732 = vmax.f32 %v700, 0.0
      %v733 = vmax.f32 %v703, 0.0
      %v734 = vmax.f32 %v708, 0.0
      %v735 = vmax.f32 %v711, 0.0
      %v736 = vmax.f32 %v716, 0.0
      %v737 = vmax.f32 %v719, 0.0
      %v738 = vld [vmem:[%s3] sm:$0x1]
      %v740 = vlaneseq
      %v741 = vshrl.u32 %v740, 7
      %v742 = vsub.s32 0, %v741
      %v743 = vrot.slane %v738, %v742
      %v745 = vmul.f32 %v722, %v743
      %v746 = vmul.f32 %v723, %v743
      %v747 = vmul.f32 %v724, %v743
      %v748 = vmul.f32 %v725, %v743
      %v749 = vmul.f32 %v726, %v743
      %v750 = vmul.f32 %v727, %v743
      %v751 = vmul.f32 %v728, %v743
      %v752 = vmul.f32 %v729, %v743
      %v753 = vmul.f32 %v730, %v743
      %v754 = vmul.f32 %v731, %v743
      %v755 = vmul.f32 %v732, %v743
      %v756 = vmul.f32 %v733, %v743
      %v757 = vmul.f32 %v734, %v743
      %v758 = vmul.f32 %v735, %v743
      %v759 = vmul.f32 %v736, %v743
      %v760 = vmul.f32 %v737, %v743
      %v761 = vld [vmem:[%s4] sm:$0x1]
      %v763 = vlaneseq
      %v764 = vshrl.u32 %v763, 7
      %v765 = vsub.s32 0, %v764
      %v766 = vrot.slane %v761, %v765
      %v768 = vadd.f32 %v745, %v766
      %v769 = vadd.f32 %v746, %v766
      %v770 = vadd.f32 %v747, %v766
      %v771 = vadd.f32 %v748, %v766
      %v772 = vadd.f32 %v749, %v766
      %v773 = vadd.f32 %v750, %v766
      %v774 = vadd.f32 %v751, %v766
      %v775 = vadd.f32 %v752, %v766
      %v776 = vadd.f32 %v753, %v766
      %v777 = vadd.f32 %v754, %v766
      %v778 = vadd.f32 %v755, %v766
      %v779 = vadd.f32 %v756, %v766
      %v780 = vadd.f32 %v757, %v766
      %v781 = vadd.f32 %v758, %v766
      %v782 = vadd.f32 %v759, %v766
      %v783 = vadd.f32 %v760, %v766
      %v784 = vpack.c.bf16 %v769, %v768
      %v785 = vpack.c.bf16 %v771, %v770
      %v786 = vpack.c.bf16 %v773, %v772
      %v787 = vpack.c.bf16 %v775, %v774
      %v788 = vpack.c.bf16 %v777, %v776
      %v789 = vpack.c.bf16 %v779, %v778
      %v790 = vpack.c.bf16 %v781, %v780
      %v791 = vpack.c.bf16 %v783, %v782
      %v792 = vld [vmem:[%s5] sm:$0xf]
      %v793 = vld [vmem:[%s5 + $0x4] sm:$0xf]
      %v794 = vld [vmem:[%s5 + $0x8] sm:$0xf]
      %v795 = vld [vmem:[%s5 + $0xc] sm:$0xf]
      %v796 = vld [vmem:[%s5 + $0x10] sm:$0xf]
      %v797 = vld [vmem:[%s5 + $0x14] sm:$0xf]
      %v798 = vld [vmem:[%s5 + $0x18] sm:$0xf]
      %v799 = vld [vmem:[%s5 + $0x1c] sm:$0xf]
      %v800 = vld [vmem:[%s5 + $0x20] sm:$0xf]
      %v801 = vld [vmem:[%s5 + $0x24] sm:$0xf]
      %v802 = vld [vmem:[%s5 + $0x28] sm:$0xf]
      %v803 = vld [vmem:[%s5 + $0x2c] sm:$0xf]
      %v804 = vld [vmem:[%s5 + $0x30] sm:$0xf]
      %v805 = vld [vmem:[%s5 + $0x34] sm:$0xf]
      %v806 = vld [vmem:[%s5 + $0x38] sm:$0xf]
      %v807 = vld [vmem:[%s5 + $0x3c] sm:$0xf]
      %v808 = vld [vmem:[%s6] sm:$0x1]
      %v810 = vlaneseq
      %v811 = vshrl.u32 %v810, 7
      %v812 = vsub.s32 0, %v811
      %v813 = vrot.slane %v808, %v812
      %v831 = vunpack.c.l.b16 %v792
      %v832 = vunpack.c.l.b16 %v793
      %v833 = vunpack.c.l.b16 %v794
      %v834 = vunpack.c.l.b16 %v795
      %v835 = vunpack.c.l.b16 %v796
      %v836 = vunpack.c.l.b16 %v797
      %v837 = vunpack.c.l.b16 %v798
      %v838 = vunpack.c.l.b16 %v799
      %v839 = vunpack.c.l.b16 %v800
      %v840 = vunpack.c.l.b16 %v801
      %v841 = vunpack.c.l.b16 %v802
      %v842 = vunpack.c.l.b16 %v803
      %v843 = vunpack.c.l.b16 %v804
      %v844 = vunpack.c.l.b16 %v805
      %v845 = vunpack.c.l.b16 %v806
      %v846 = vunpack.c.l.b16 %v807
      %v847 = vpack.c.b16 %v832, %v831
      %v848 = vpack.c.b16 %v834, %v833
      %v849 = vpack.c.b16 %v836, %v835
      %v850 = vpack.c.b16 %v838, %v837
      %v851 = vpack.c.b16 %v840, %v839
      %v852 = vpack.c.b16 %v842, %v841
      %v853 = vpack.c.b16 %v844, %v843
      %v854 = vpack.c.b16 %v846, %v845
      %863 = vmatprep.subr.bf16.mxu0 0
      %864 = vmatpush1.bf16.msra.mxu0 %v854
      %865 = vmatprep.subr.bf16.mxu0 0
      %866 = vmatpush1.bf16.msra.mxu0 %v853
      %867 = vmatprep.subr.bf16.mxu0 0
      %868 = vmatpush1.bf16.msra.mxu0 %v852
      %869 = vmatprep.subr.bf16.mxu0 0
      %870 = vmatpush1.bf16.msra.mxu0 %v851
      %871 = vmatprep.subr.bf16.mxu0 0
      %872 = vmatpush1.bf16.msra.mxu0 %v850
      %873 = vmatprep.subr.bf16.mxu0 0
      %874 = vmatpush1.bf16.msra.mxu0 %v849
      %875 = vmatprep.subr.bf16.mxu0 0
      %876 = vmatpush1.bf16.msra.mxu0 %v848
      %877 = vmatprep.subr.bf16.mxu0 0
      %878 = vmatpush1.bf16.msra.mxu0 %v847
      %879 = vmatprep.subr.bf16.mxu0 0
      %880 = vmatpush2.bf16.msra.mxu0 0
      %881 = vmatprep.subr.bf16.mxu0 0
      %882 = vmatpush2.bf16.msra.mxu0 0
      %883 = vmatprep.subr.bf16.mxu0 0
      %884 = vmatpush2.bf16.msra.mxu0 0
      %885 = vmatprep.subr.bf16.mxu0 0
      %886 = vmatpush2.bf16.msra.mxu0 0
      %887 = vmatprep.subr.bf16.mxu0 0
      %888 = vmatpush2.bf16.msra.mxu0 0
      %889 = vmatprep.subr.bf16.mxu0 0
      %890 = vmatpush2.bf16.msra.mxu0 0
      %891 = vmatprep.subr.bf16.mxu0 0
      %892 = vmatpush2.bf16.msra.mxu0 0
      %893 = vmatprep.subr.bf16.mxu0 0
      %894 = vmatpush2.bf16.msra.mxu0 0
      %895 = vmatprep.mubr.bf16.mxu0 0
      %896 = vmatmul.mubr.bf16.gmra.mxu0 %v784
      %v897 = vpop.f32.mrf.mxu0
      %v898 = vadd.f32 %v813, %v897
      %v899 = vpop.f32.mrf.mxu0
      %v900 = vpop.f32.mrf.mxu0
      %v901 = vadd.f32 %v813, %v900
      %v902 = vpop.f32.mrf.mxu0
      %903 = vmatprep.mubr.bf16.mxu0 0
      %904 = vmatmul.mubr.bf16.gmra.mxu0 %v785
      %v905 = vpop.f32.mrf.mxu0
      %v906 = vadd.f32 %v813, %v905
      %v907 = vpop.f32.mrf.mxu0
      %v908 = vpop.f32.mrf.mxu0
      %v909 = vadd.f32 %v813, %v908
      %v910 = vpop.f32.mrf.mxu0
      %911 = vmatprep.mubr.bf16.mxu0 0
      %912 = vmatmul.mubr.bf16.gmra.mxu0 %v786
      %v913 = vpop.f32.mrf.mxu0
      %v914 = vadd.f32 %v813, %v913
      %v915 = vpop.f32.mrf.mxu0
      %v916 = vpop.f32.mrf.mxu0
      %v917 = vadd.f32 %v813, %v916
      %v918 = vpop.f32.mrf.mxu0
      %919 = vmatprep.mubr.bf16.mxu0 0
      %920 = vmatmul.mubr.bf16.gmra.mxu0 %v787
      %v921 = vpop.f32.mrf.mxu0
      %v922 = vadd.f32 %v813, %v921
      %v923 = vpop.f32.mrf.mxu0
      %v924 = vpop.f32.mrf.mxu0
      %v925 = vadd.f32 %v813, %v924
      %v926 = vpop.f32.mrf.mxu0
      %927 = vmatprep.mubr.bf16.mxu0 0
      %928 = vmatmul.mubr.bf16.gmra.mxu0 %v788
      %v929 = vpop.f32.mrf.mxu0
      %v930 = vadd.f32 %v813, %v929
      %v931 = vpop.f32.mrf.mxu0
      %v932 = vpop.f32.mrf.mxu0
      %v933 = vadd.f32 %v813, %v932
      %v934 = vpop.f32.mrf.mxu0
      %935 = vmatprep.mubr.bf16.mxu0 0
      %936 = vmatmul.mubr.bf16.gmra.mxu0 %v789
      %v937 = vpop.f32.mrf.mxu0
      %v938 = vadd.f32 %v813, %v937
      %v939 = vpop.f32.mrf.mxu0
      %v940 = vpop.f32.mrf.mxu0
      %v941 = vadd.f32 %v813, %v940
      %v942 = vpop.f32.mrf.mxu0
      %943 = vmatprep.mubr.bf16.mxu0 0
      %944 = vmatmul.mubr.bf16.gmra.mxu0 %v790
      %v945 = vpop.f32.mrf.mxu0
      %v946 = vadd.f32 %v813, %v945
      %v947 = vpop.f32.mrf.mxu0
      %v948 = vpop.f32.mrf.mxu0
      %v949 = vadd.f32 %v813, %v948
      %v950 = vpop.f32.mrf.mxu0
      %951 = vmatprep.mubr.bf16.mxu0 0
      %952 = vmatmul.mubr.bf16.gmra.mxu0 %v791
      %v953 = vpop.f32.mrf.mxu0
      %v954 = vadd.f32 %v813, %v953
      %v955 = vpop.f32.mrf.mxu0
      %v956 = vpop.f32.mrf.mxu0
      %v957 = vadd.f32 %v813, %v956
      %v958 = vpop.f32.mrf.mxu0
      %959 = vdwg.mxu0
      %v960 = vmax.f32 %v898, 0.0
      %v961 = vmax.f32 %v901, 0.0
      %v962 = vmax.f32 %v906, 0.0
      %v963 = vmax.f32 %v909, 0.0
      %v964 = vmax.f32 %v914, 0.0
      %v965 = vmax.f32 %v917, 0.0
      %v966 = vmax.f32 %v922, 0.0
      %v967 = vmax.f32 %v925, 0.0
      %v968 = vmax.f32 %v930, 0.0
      %v969 = vmax.f32 %v933, 0.0
      %v970 = vmax.f32 %v938, 0.0
      %v971 = vmax.f32 %v941, 0.0
      %v972 = vmax.f32 %v946, 0.0
      %v973 = vmax.f32 %v949, 0.0
      %v974 = vmax.f32 %v954, 0.0
      %v975 = vmax.f32 %v957, 0.0
      %v976 = vld [vmem:[%s7] sm:$0x1]
      %v978 = vlaneseq
      %v979 = vshrl.u32 %v978, 7
      %v980 = vsub.s32 0, %v979
      %v981 = vrot.slane %v976, %v980
      %v983 = vmul.f32 %v960, %v981
      %v984 = vmul.f32 %v961, %v981
      %v985 = vmul.f32 %v962, %v981
      %v986 = vmul.f32 %v963, %v981
      %v987 = vmul.f32 %v964, %v981
      %v988 = vmul.f32 %v965, %v981
      %v989 = vmul.f32 %v966, %v981
      %v990 = vmul.f32 %v967, %v981
      %v991 = vmul.f32 %v968, %v981
      %v992 = vmul.f32 %v969, %v981
      %v993 = vmul.f32 %v970, %v981
      %v994 = vmul.f32 %v971, %v981
      %v995 = vmul.f32 %v972, %v981
      %v996 = vmul.f32 %v973, %v981
      %v997 = vmul.f32 %v974, %v981
      %v998 = vmul.f32 %v975, %v981
      %v999 = vld [vmem:[%s8] sm:$0x1]
      %v1001 = vlaneseq
      %v1002 = vshrl.u32 %v1001, 7
      %v1003 = vsub.s32 0, %v1002
      %v1004 = vrot.slane %v999, %v1003
      %v1006 = vadd.f32 %v983, %v1004
      %v1007 = vadd.f32 %v984, %v1004
      %v1008 = vadd.f32 %v985, %v1004
      %v1009 = vadd.f32 %v986, %v1004
      %v1010 = vadd.f32 %v987, %v1004
      %v1011 = vadd.f32 %v988, %v1004
      %v1012 = vadd.f32 %v989, %v1004
      %v1013 = vadd.f32 %v990, %v1004
      %v1014 = vadd.f32 %v991, %v1004
      %v1015 = vadd.f32 %v992, %v1004
      %v1016 = vadd.f32 %v993, %v1004
      %v1017 = vadd.f32 %v994, %v1004
      %v1018 = vadd.f32 %v995, %v1004
      %v1019 = vadd.f32 %v996, %v1004
      %v1020 = vadd.f32 %v997, %v1004
      %v1021 = vadd.f32 %v998, %v1004
      %v1022 = vpack.c.bf16 %v1007, %v1006
      %v1023 = vpack.c.bf16 %v1009, %v1008
      %v1024 = vpack.c.bf16 %v1011, %v1010
      %v1025 = vpack.c.bf16 %v1013, %v1012
      %v1026 = vpack.c.bf16 %v1015, %v1014
      %v1027 = vpack.c.bf16 %v1017, %v1016
      %v1028 = vpack.c.bf16 %v1019, %v1018
      %v1029 = vpack.c.bf16 %v1021, %v1020
      %v1030 = vld [vmem:[%s9] sm:$0xf]
      %v1031 = vld [vmem:[%s9 + $0x4] sm:$0xf]
      %v1032 = vld [vmem:[%s9 + $0x8] sm:$0xf]
      %v1033 = vld [vmem:[%s9 + $0xc] sm:$0xf]
      %v1034 = vld [vmem:[%s9 + $0x10] sm:$0xf]
      %v1035 = vld [vmem:[%s9 + $0x14] sm:$0xf]
      %v1036 = vld [vmem:[%s9 + $0x18] sm:$0xf]
      %v1037 = vld [vmem:[%s9 + $0x1c] sm:$0xf]
      %v1038 = vld [vmem:[%s9 + $0x20] sm:$0xf]
      %v1039 = vld [vmem:[%s9 + $0x24] sm:$0xf]
      %v1040 = vld [vmem:[%s9 + $0x28] sm:$0xf]
      %v1041 = vld [vmem:[%s9 + $0x2c] sm:$0xf]
      %v1042 = vld [vmem:[%s9 + $0x30] sm:$0xf]
      %v1043 = vld [vmem:[%s9 + $0x34] sm:$0xf]
      %v1044 = vld [vmem:[%s9 + $0x38] sm:$0xf]
      %v1045 = vld [vmem:[%s9 + $0x3c] sm:$0xf]
      %v1046 = vld [vmem:[%s10] sm:$0x1]
      %v1048 = vlaneseq
      %v1049 = vshrl.u32 %v1048, 7
      %v1050 = vsub.s32 0, %v1049
      %v1051 = vrot.slane %v1046, %v1050
      %v1069 = vunpack.c.l.b16 %v1030
      %v1070 = vunpack.c.l.b16 %v1031
      %v1071 = vunpack.c.l.b16 %v1032
      %v1072 = vunpack.c.l.b16 %v1033
      %v1073 = vunpack.c.l.b16 %v1034
      %v1074 = vunpack.c.l.b16 %v1035
      %v1075 = vunpack.c.l.b16 %v1036
      %v1076 = vunpack.c.l.b16 %v1037
      %v1077 = vunpack.c.l.b16 %v1038
      %v1078 = vunpack.c.l.b16 %v1039
      %v1079 = vunpack.c.l.b16 %v1040
      %v1080 = vunpack.c.l.b16 %v1041
      %v1081 = vunpack.c.l.b16 %v1042
      %v1082 = vunpack.c.l.b16 %v1043
      %v1083 = vunpack.c.l.b16 %v1044
      %v1084 = vunpack.c.l.b16 %v1045
      %v1085 = vpack.c.b16 %v1070, %v1069
      %v1086 = vpack.c.b16 %v1072, %v1071
      %v1087 = vpack.c.b16 %v1074, %v1073
      %v1088 = vpack.c.b16 %v1076, %v1075
      %v1089 = vpack.c.b16 %v1078, %v1077
      %v1090 = vpack.c.b16 %v1080, %v1079
      %v1091 = vpack.c.b16 %v1082, %v1081
      %v1092 = vpack.c.b16 %v1084, %v1083
      %1101 = vmatprep.subr.bf16.mxu0 0
      %1102 = vmatpush1.bf16.msra.mxu0 %v1092
      %1103 = vmatprep.subr.bf16.mxu0 0
      %1104 = vmatpush1.bf16.msra.mxu0 %v1091
      %1105 = vmatprep.subr.bf16.mxu0 0
      %1106 = vmatpush1.bf16.msra.mxu0 %v1090
      %1107 = vmatprep.subr.bf16.mxu0 0
      %1108 = vmatpush1.bf16.msra.mxu0 %v1089
      %1109 = vmatprep.subr.bf16.mxu0 0
      %1110 = vmatpush1.bf16.msra.mxu0 %v1088
      %1111 = vmatprep.subr.bf16.mxu0 0
      %1112 = vmatpush1.bf16.msra.mxu0 %v1087
      %1113 = vmatprep.subr.bf16.mxu0 0
      %1114 = vmatpush1.bf16.msra.mxu0 %v1086
      %1115 = vmatprep.subr.bf16.mxu0 0
      %1116 = vmatpush1.bf16.msra.mxu0 %v1085
      %1117 = vmatprep.subr.bf16.mxu0 0
      %1118 = vmatpush2.bf16.msra.mxu0 0
      %1119 = vmatprep.subr.bf16.mxu0 0
      %1120 = vmatpush2.bf16.msra.mxu0 0
      %1121 = vmatprep.subr.bf16.mxu0 0
      %1122 = vmatpush2.bf16.msra.mxu0 0
      %1123 = vmatprep.subr.bf16.mxu0 0
      %1124 = vmatpush2.bf16.msra.mxu0 0
      %1125 = vmatprep.subr.bf16.mxu0 0
      %1126 = vmatpush2.bf16.msra.mxu0 0
      %1127 = vmatprep.subr.bf16.mxu0 0
      %1128 = vmatpush2.bf16.msra.mxu0 0
      %1129 = vmatprep.subr.bf16.mxu0 0
      %1130 = vmatpush2.bf16.msra.mxu0 0
      %1131 = vmatprep.subr.bf16.mxu0 0
      %1132 = vmatpush2.bf16.msra.mxu0 0
      %1133 = vmatprep.mubr.bf16.mxu0 0
      %1134 = vmatmul.mubr.bf16.gmra.mxu0 %v1022
      %v1135 = vpop.f32.mrf.mxu0
      %v1136 = vadd.f32 %v1051, %v1135
      %v1137 = vpop.f32.mrf.mxu0
      %v1138 = vpop.f32.mrf.mxu0
      %v1139 = vadd.f32 %v1051, %v1138
      %v1140 = vpop.f32.mrf.mxu0
      %1141 = vmatprep.mubr.bf16.mxu0 0
      %1142 = vmatmul.mubr.bf16.gmra.mxu0 %v1023
      %v1143 = vpop.f32.mrf.mxu0
      %v1144 = vadd.f32 %v1051, %v1143
      %v1145 = vpop.f32.mrf.mxu0
      %v1146 = vpop.f32.mrf.mxu0
      %v1147 = vadd.f32 %v1051, %v1146
      %v1148 = vpop.f32.mrf.mxu0
      %1149 = vmatprep.mubr.bf16.mxu0 0
      %1150 = vmatmul.mubr.bf16.gmra.mxu0 %v1024
      %v1151 = vpop.f32.mrf.mxu0
      %v1152 = vadd.f32 %v1051, %v1151
      %v1153 = vpop.f32.mrf.mxu0
      %v1154 = vpop.f32.mrf.mxu0
      %v1155 = vadd.f32 %v1051, %v1154
      %v1156 = vpop.f32.mrf.mxu0
      %1157 = vmatprep.mubr.bf16.mxu0 0
      %1158 = vmatmul.mubr.bf16.gmra.mxu0 %v1025
      %v1159 = vpop.f32.mrf.mxu0
      %v1160 = vadd.f32 %v1051, %v1159
      %v1161 = vpop.f32.mrf.mxu0
      %v1162 = vpop.f32.mrf.mxu0
      %v1163 = vadd.f32 %v1051, %v1162
      %v1164 = vpop.f32.mrf.mxu0
      %1165 = vmatprep.mubr.bf16.mxu0 0
      %1166 = vmatmul.mubr.bf16.gmra.mxu0 %v1026
      %v1167 = vpop.f32.mrf.mxu0
      %v1168 = vadd.f32 %v1051, %v1167
      %v1169 = vpop.f32.mrf.mxu0
      %v1170 = vpop.f32.mrf.mxu0
      %v1171 = vadd.f32 %v1051, %v1170
      %v1172 = vpop.f32.mrf.mxu0
      %1173 = vmatprep.mubr.bf16.mxu0 0
      %1174 = vmatmul.mubr.bf16.gmra.mxu0 %v1027
      %v1175 = vpop.f32.mrf.mxu0
      %v1176 = vadd.f32 %v1051, %v1175
      %v1177 = vpop.f32.mrf.mxu0
      %v1178 = vpop.f32.mrf.mxu0
      %v1179 = vadd.f32 %v1051, %v1178
      %v1180 = vpop.f32.mrf.mxu0
      %1181 = vmatprep.mubr.bf16.mxu0 0
      %1182 = vmatmul.mubr.bf16.gmra.mxu0 %v1028
      %v1183 = vpop.f32.mrf.mxu0
      %v1184 = vadd.f32 %v1051, %v1183
      %v1185 = vpop.f32.mrf.mxu0
      %v1186 = vpop.f32.mrf.mxu0
      %v1187 = vadd.f32 %v1051, %v1186
      %v1188 = vpop.f32.mrf.mxu0
      %1189 = vmatprep.mubr.bf16.mxu0 0
      %1190 = vmatmul.mubr.bf16.gmra.mxu0 %v1029
      %v1191 = vpop.f32.mrf.mxu0
      %v1192 = vadd.f32 %v1051, %v1191
      %v1193 = vpop.f32.mrf.mxu0
      %v1194 = vpop.f32.mrf.mxu0
      %v1195 = vadd.f32 %v1051, %v1194
      %v1196 = vpop.f32.mrf.mxu0
      %1197 = vdwg.mxu0
      %1198 = vst [vmem:[%s391] sm:$0xff] %v1136
      %1199 = vst [vmem:[%s391 + $0x8] sm:$0xff] %v1139
      %1200 = vst [vmem:[%s391 + $0x10] sm:$0xff] %v1144
      %1201 = vst [vmem:[%s391 + $0x18] sm:$0xff] %v1147
      %1202 = vst [vmem:[%s391 + $0x20] sm:$0xff] %v1152
      %1203 = vst [vmem:[%s391 + $0x28] sm:$0xff] %v1155
      %1204 = vst [vmem:[%s391 + $0x30] sm:$0xff] %v1160
      %1205 = vst [vmem:[%s391 + $0x38] sm:$0xff] %v1163
      %1206 = vst [vmem:[%s391 + $0x40] sm:$0xff] %v1168
      %1207 = vst [vmem:[%s391 + $0x48] sm:$0xff] %v1171
      %1208 = vst [vmem:[%s391 + $0x50] sm:$0xff] %v1176
      %1209 = vst [vmem:[%s391 + $0x58] sm:$0xff] %v1179
      %1210 = vst [vmem:[%s391 + $0x60] sm:$0xff] %v1184
      %1211 = vst [vmem:[%s391 + $0x68] sm:$0xff] %v1187
      %1212 = vst [vmem:[%s391 + $0x70] sm:$0xff] %v1192
      %1213 = vst [vmem:[%s391 + $0x78] sm:$0xff] %v1195
      %s1214 = smul.u32 16, %s22
      %p1215 = scmp.lt.s32.totalorder %s1214, 31
      %s1216 = scalar_select %p1215, %s1214, 31
      %s1217 = smul.addr %s1216, 8
      %s1218 = scalar_lea.vmem %s11, %s1217
      // Predicated region
      $region65: #{mlp_forward.1} parent=63 // pred_check
        %p1219 = pneg %p276
      $region66: #{mlp_forward.1} parent=63 // pred_check_branch
        %1221 = sbr.rel (%p1219) target = $region68
      $region67: #{mlp_forward.1} parent=63 // pred_region
        %s1222 = smul.u32 16, %s22
      $region68: #{mlp_forward.1} parent=63 // pred_fallthru
        _
    $region64: #{mlp_forward.1} parent=5 // pred_fallthru
      _
    %p1223 = scmp.le.s32.totalorder 2, %s17
    // Predicated region
    $region69: #{mlp_forward.1} parent=5 // pred_check
      %p1224 = pneg %p1223
    $region70: #{mlp_forward.1} parent=5 // pred_check_branch
      %1226 = sbr.rel (%p1224) target = $region72
    $region71: #{mlp_forward.1} parent=5 // pred_region
      %s1227 = ssub.s32 %s17, 2
      // Predicated region
      $region73: #{mlp_forward.1} parent=71 // pred_check
        %p1228 = pneg %p282
      $region74: #{mlp_forward.1} parent=71 // pred_check_branch
        %1230 = sbr.rel (%p1228) target = $region76
      $region75: #{mlp_forward.1} parent=71 // pred_region
        %s1231 = smul.u32 16, %s23
        %p1232 = scmp.lt.s32.totalorder %s1231, 31
        %s1233 = scalar_select %p1232, %s1231, 31
        %s1234 = smul.addr %s1233, 8
        %s1235 = scalar_lea.vmem %s11, %s1234
      $region76: #{mlp_forward.1} parent=71 // pred_fallthru
        _
    $region72: #{mlp_forward.1} parent=5 // pred_fallthru
      _
  $region6: #{mlp_forward.1} parent=0 // loop_footer
    %s21 = sadd.s32 1, %s17
  $region7: #{mlp_forward.1} parent=0 // loop_footer_branch
    %16 = sbr.rel target = $region3
  $region8: #{mlp_forward.1} parent=0 // loop_exit
    _

</llo_original>
